<compile_context>
chip_gen: v7x
topology: tpu7x:2x2x1
jax: 0.10.0
libtpu: 0.0.40
codegen_flags: <defaults>
</compile_context>

<pallas_src>
import functools

import jax
import jax.numpy as jnp
from jax import lax
from jax.experimental import pallas as pl
from jax.experimental.pallas import tpu as pltpu


def _round_up(x, m):
    return ((x + m - 1) // m) * m


def _vmem_limit_bytes():
    """Per-chip scoped-VMEM budget: 3/4 of physical, capped at 96 MiB."""
    try:
        cap = int(pltpu.get_tpu_info().vmem_capacity_bytes)
    except Exception:
        cap = 64 << 20  # conservative (v7x per-TC) fallback
    return min((cap * 3) // 4, 96 << 20)


def _focal_ce_kernel(logits_ref, targets_ref, out_ref, *, gamma, n_valid, tile_n):
    i = pl.program_id(0)

    x = logits_ref[...].astype(jnp.float32)              # (TILE_N, C)
    tgt = targets_ref[...]                                # (TILE_N, 1) int32
    tn, c = x.shape

    # Numerically-stable row softmax pieces; only per-row scalars are kept.
    m = jnp.max(x, axis=1, keepdims=True)                 # XLU reduce 1
    shifted = x - m                                       # (TILE_N, C)
    e = jnp.exp(shifted)                                  # (TILE_N, C) EUP

    # Target-column selection via iota compare (bool mask, no float one-hot).
    col = lax.broadcasted_iota(jnp.int32, (tn, c), 1)
    mask = col == tgt                                     # (TILE_N, C) bool

    # Sum of non-target exps directly (cancellation-free 1 - pt), plus the
    # target's shifted logit; its exp is a cheap per-row EUP op.
    others = jnp.sum(jnp.where(mask, 0.0, e), axis=1, keepdims=True)           # XLU 2
    shifted_t = jnp.sum(jnp.where(mask, shifted, 0.0), axis=1, keepdims=True)  # XLU 3
    exp_t = jnp.exp(shifted_t)                            # (TILE_N, 1)

    denom = exp_t + others                                # (TILE_N, 1)
    log_pt = shifted_t - jnp.log(denom)                   # log_softmax at target
    one_minus_pt = others / denom                         # exact 1 - pt

    # Focal weight on the per-row vector only.
    g_int = int(gamma)
    if float(g_int) == float(gamma) and 0 <= g_int <= 8:
        w = jnp.ones_like(one_minus_pt)
        for _ in range(g_int):                            # gamma=2 -> two VPU multiplies
            w = w * one_minus_pt
    else:
        # Fractional gamma: guard pow(0, gamma) lowering (exp(g*log(0))) from NaN.
        safe = jnp.maximum(one_minus_pt, jnp.float32(1e-30))
        w = jnp.where(one_minus_pt > 0.0,
                      jnp.power(safe, jnp.float32(gamma)),
                      jnp.zeros_like(one_minus_pt))

    loss_row = -(w * log_pt)                              # (TILE_N, 1)

    # Mask rows past the true batch size (ragged last block, unpadded input).
    # Applied BEFORE the sum so undefined/NaN garbage rows contribute exactly 0.
    row = lax.broadcasted_iota(jnp.int32, (tn, 1), 0) + i * tile_n
    loss_row = jnp.where(row < n_valid, loss_row, 0.0)

    partial = jnp.sum(loss_row)                           # scalar partial sum
    out_ref[...] = jnp.full(out_ref.shape, partial, jnp.float32)


def focal_ce_loss(logits, targets, gamma=2.0, tile_n=None):
    """logits: (N, C) float (f32 or bf16), targets: (N,) int. Returns scalar f32 loss.

    bf16 logits are the recommended input dtype on bandwidth-limited parts
    (v5e especially); the kernel upcasts to f32 internally.
    """
    n, c = logits.shape
    itemsize = jnp.dtype(logits.dtype).itemsize

    vmem_limit = _vmem_limit_bytes()

    if tile_n is None:
        # Byte-budgeted tile: multi-MiB logits tiles to amortise the ~0.35 us
        # per-grid-step overhead, sized against the *real* VMEM working set:
        # double-buffered input tile + ~6 live (TILE_N, C) f32 temporaries.
        per_row_vmem = 2 * c * itemsize + 6 * c * 4
        tile_n = (vmem_limit * 3 // 4) // max(per_row_vmem, 1)
        # Also cap the raw input tile at ~8 MiB (plenty to hit HBM roofline).
        tile_n = min(tile_n, (8 << 20) // max(c * itemsize, 1))
    tile_n = max(8, (tile_n // 8) * 8)
    tile_n = min(tile_n, _round_up(n, 8))

    # Keep at least two row tiles when possible so the ("parallel",) axis can
    # shard across both TensorCores on v7x megacore.
    if tile_n >= n and n >= 16:
        tile_n = _round_up((n + 1) // 2, 8)

    num_tiles = pl.cdiv(n, tile_n)

    # Targets as a tiny (N, 1) int32 column; no padding of the logits at all.
    targets2d = targets.astype(jnp.int32).reshape(n, 1)

    kernel = functools.partial(
        _focal_ce_kernel, gamma=float(gamma), n_valid=n, tile_n=tile_n
    )

    cost = pl.CostEstimate(
        flops=8 * n * c,
        transcendentals=n * c + 3 * n,   # exp per element + per-row exp/log/pow
        bytes_accessed=n * c * itemsize + n * 4 + num_tiles * 128 * 4,
    )

    partials = pl.pallas_call(
        kernel,
        out_shape=jax.ShapeDtypeStruct((num_tiles, 1, 128), jnp.float32),
        grid=(num_tiles,),
        in_specs=[
            pl.BlockSpec((tile_n, c), lambda i: (i, 0)),   # logits row tile
            pl.BlockSpec((tile_n, 1), lambda i: (i, 0)),   # targets row tile
        ],
        out_specs=pl.BlockSpec((1, 1, 128), lambda i: (i, 0, 0)),  # lane-dense partial
        compiler_params=pltpu.CompilerParams(
            dimension_semantics=("parallel",),             # megacore shards row tiles
            vmem_limit_bytes=vmem_limit,
        ),
        cost_estimate=cost,
    )(logits, targets2d)

    # Tiny final reduce + mean over the true batch size (masked rows contributed 0).
    return jnp.sum(partials[:, 0, 0]) / jnp.float32(n)


def _focal_ce_ref(logits, targets, gamma=2.0):
    """Pure-JAX reference mirroring the PyTorch module."""
    logits = logits.astype(jnp.float32)
    softmax = jax.nn.softmax(logits, axis=1)
    one_hot = jax.nn.one_hot(targets, logits.shape[1], dtype=jnp.float32)
    pt = jnp.where(one_hot == 1.0, softmax, 1.0 - softmax)
    focal_weight = jnp.power(1.0 - pt, gamma)
    loss = -jax.nn.log_softmax(logits, axis=1) * one_hot
    loss = focal_weight * loss
    loss = loss.sum(axis=1)
    return loss.mean()


if __name__ == "__main__":
    key = jax.random.PRNGKey(0)
    k1, k2, k3, k4, k5, k6 = jax.random.split(key, 6)

    # Case 1: small shape matching the module spec (gamma = 2, default tiling).
    N, C, GAMMA = 8, 16, 2.0
    logits = jax.random.normal(k1, (N, C), dtype=jnp.float32)
    targets = jax.random.randint(k2, (N,), 0, C, dtype=jnp.int32)
    loss = jax.block_until_ready(focal_ce_loss(logits, targets, gamma=GAMMA))
    ref = _focal_ce_ref(logits, targets, gamma=GAMMA)
    assert jnp.allclose(loss, ref, atol=1e-5, rtol=1e-4), (loss, ref)

    # Case 2: N not a multiple of the tile -> ragged (unpadded) last block,
    # multiple grid steps, integer gamma=3.
    N2, C2 = 50, 128
    logits2 = jax.random.normal(k3, (N2, C2), dtype=jnp.float32)
    targets2 = jax.random.randint(k4, (N2,), 0, C2, dtype=jnp.int32)
    loss2 = jax.block_until_ready(focal_ce_loss(logits2, targets2, gamma=3.0, tile_n=16))
    ref2 = _focal_ce_ref(logits2, targets2, gamma=3.0)
    assert jnp.allclose(loss2, ref2, atol=1e-5, rtol=1e-4), (loss2, ref2)

    # Case 3: bf16 logits in HBM (halves bytes moved; kernel upcasts internally),
    # default byte-budgeted tiling (split into >=2 tiles for megacore).
    N3, C3 = 16, 128
    logits3 = jax.random.normal(k5, (N3, C3), dtype=jnp.bfloat16)
    targets3 = jax.random.randint(k6, (N3,), 0, C3, dtype=jnp.int32)
    loss3 = jax.block_until_ready(focal_ce_loss(logits3, targets3, gamma=2.0))
    ref3 = _focal_ce_ref(logits3, targets3, gamma=2.0)
    assert jnp.allclose(loss3, ref3, atol=1e-5, rtol=1e-4), (loss3, ref3)

    # Case 4: fractional gamma path (pow guard).
    loss4 = jax.block_until_ready(focal_ce_loss(logits2, targets2, gamma=1.5))
    ref4 = _focal_ce_ref(logits2, targets2, gamma=1.5)
    assert jnp.allclose(loss4, ref4, atol=1e-5, rtol=1e-4), (loss4, ref4)

    print("KERNEL_OK")
</pallas_src>

<mosaic_0001>
module attributes {stable_mosaic.version = 11 : i64} {
  func.func @_focal_ce_kernel(%arg0: i32, %arg1: memref<8x16xf32, #tpu.memory_space<vmem>>, %arg2: memref<8x1xi32, #tpu.memory_space<vmem>>, %arg3: memref<1x1x128xf32, #tpu.memory_space<vmem>>) attributes {dimension_semantics = [#tpu.dimension_semantics<parallel>], iteration_bounds = array<i64: 1>, scalar_prefetch = 0 : i64, scratch_operands = 0 : i64, tpu.core_type = #tpu.core_type<tc>, window_params = [{transform_indices = @transform_0, window_bounds = array<i64: 8, 16>}, {transform_indices = @transform_1, window_bounds = array<i64: 8, 1>}, {transform_indices = @transform_2, window_bounds = array<i64: 1, 1, 128>}]} {
    %c0 = arith.constant 0 : index
    %c0_0 = arith.constant 0 : index
    %0 = vector.load %arg1[%c0, %c0_0] : memref<8x16xf32, #tpu.memory_space<vmem>>, vector<8x16xf32>
    %c0_1 = arith.constant 0 : index
    %c0_2 = arith.constant 0 : index
    %1 = vector.load %arg2[%c0_1, %c0_2] : memref<8x1xi32, #tpu.memory_space<vmem>>, vector<8x1xi32>
    %cst = arith.constant dense<0xFF800000> : vector<8xf32>
    %2 = vector.multi_reduction <maximumf>, %0, %cst [1] : vector<8x16xf32> to vector<8xf32>
    %3 = vector.shape_cast %2 : vector<8xf32> to vector<8x1xf32>
    %4 = vector.broadcast %3 : vector<8x1xf32> to vector<8x16xf32>
    %5 = arith.subf %0, %4 : vector<8x16xf32>
    %6 = math.exp %5 : vector<8x16xf32>
    %7 = tpu.iota {dimensions = array<i32: 1>} : vector<8x16xi32>
    %8 = vector.broadcast %1 : vector<8x1xi32> to vector<8x16xi32>
    %9 = arith.cmpi eq, %7, %8 : vector<8x16xi32>
    %cst_3 = arith.constant 0.000000e+00 : f32
    %10 = vector.broadcast %cst_3 : f32 to vector<8x16xf32>
    %11 = arith.select %9, %10, %6 : vector<8x16xi1>, vector<8x16xf32>
    %cst_4 = arith.constant dense<0.000000e+00> : vector<8xf32>
    %12 = vector.multi_reduction <add>, %11, %cst_4 [1] : vector<8x16xf32> to vector<8xf32>
    %13 = vector.shape_cast %12 : vector<8xf32> to vector<8x1xf32>
    %cst_5 = arith.constant 0.000000e+00 : f32
    %14 = vector.broadcast %cst_5 : f32 to vector<8x16xf32>
    %15 = arith.select %9, %5, %14 : vector<8x16xi1>, vector<8x16xf32>
    %cst_6 = arith.constant dense<0.000000e+00> : vector<8xf32>
    %16 = vector.multi_reduction <add>, %15, %cst_6 [1] : vector<8x16xf32> to vector<8xf32>
    %17 = vector.shape_cast %16 : vector<8xf32> to vector<8x1xf32>
    %18 = math.exp %17 : vector<8x1xf32>
    %19 = arith.addf %18, %13 : vector<8x1xf32>
    %20 = math.log %19 : vector<8x1xf32>
    %21 = arith.subf %17, %20 : vector<8x1xf32>
    %22 = arith.divf %13, %19 : vector<8x1xf32>
    %cst_7 = arith.constant 1.000000e+00 : f32
    %23 = vector.broadcast %cst_7 : f32 to vector<8x1xf32>
    %24 = arith.mulf %23, %22 : vector<8x1xf32>
    %25 = arith.mulf %24, %22 : vector<8x1xf32>
    %26 = arith.mulf %25, %21 : vector<8x1xf32>
    %cst_8 = arith.constant 0.000000e+00 : f32
    %27 = vector.broadcast %cst_8 : f32 to vector<8x1xf32>
    %28 = arith.subf %27, %26 : vector<8x1xf32>
    %29 = tpu.iota {dimensions = array<i32: 0>} : vector<8x1xi32>
    %c8_i32 = arith.constant 8 : i32
    %30 = arith.muli %arg0, %c8_i32 : i32
    %31 = vector.broadcast %30 : i32 to vector<8x1xi32>
    %32 = arith.addi %29, %31 : vector<8x1xi32>
    %c8_i32_9 = arith.constant 8 : i32
    %33 = vector.broadcast %c8_i32_9 : i32 to vector<8x1xi32>
    %34 = arith.cmpi slt, %32, %33 : vector<8x1xi32>
    %cst_10 = arith.constant 0.000000e+00 : f32
    %35 = vector.broadcast %cst_10 : f32 to vector<8x1xf32>
    %36 = arith.select %34, %28, %35 : vector<8x1xi1>, vector<8x1xf32>
    %37 = vector.shape_cast %36 : vector<8x1xf32> to vector<1x8x1xf32>
    %cst_11 = arith.constant dense<0.000000e+00> : vector<1xf32>
    %38 = vector.multi_reduction <add>, %37, %cst_11 [1, 2] : vector<1x8x1xf32> to vector<1xf32>
    %39 = vector.shape_cast %38 : vector<1xf32> to vector<1x1x1xf32>
    %40 = vector.extract %39[0, 0, 0] : f32 from vector<1x1x1xf32>
    %41 = vector.broadcast %40 : f32 to vector<1x1x128xf32>
    %c0_12 = arith.constant 0 : index
    %c0_13 = arith.constant 0 : index
    %c0_14 = arith.constant 0 : index
    %42 = vector.load %arg3[%c0_12, %c0_13, %c0_14] : memref<1x1x128xf32, #tpu.memory_space<vmem>>, vector<1x1x128xf32>
    tpu.vector_store %arg3[%c0_12, %c0_13, %c0_14], %41 {strides = array<i32>} : memref<1x1x128xf32, #tpu.memory_space<vmem>>, vector<1x1x128xf32>,
    return
  }
  func.func @transform_0(%arg0: i32) -> (i32, i32) {
    %c0_i32 = arith.constant 0 : i32
    %c0_i32_0 = arith.constant 0 : i32
    return %arg0, %c0_i32 : i32, i32
  }
  func.func @transform_1(%arg0: i32) -> (i32, i32) {
    %c0_i32 = arith.constant 0 : i32
    %c0_i32_0 = arith.constant 0 : i32
    return %arg0, %c0_i32 : i32, i32
  }
  func.func @transform_2(%arg0: i32) -> (i32, i32, i32) {
    %c0_i32 = arith.constant 0 : i32
    %c0_i32_0 = arith.constant 0 : i32
    %c0_i32_1 = arith.constant 0 : i32
    return %arg0, %c0_i32, %c0_i32_0 : i32, i32, i32
  }
}

</mosaic_0001>

<llo_original>
// kernel: tpu_custom_call.1
$region0: #{tpu_custom_call.1}
  #allocation0 [shape = 'u32[]', space=smem, size = 0x4, offset = 0x4, fixed_abs, tag = 'smem constant byte address 0x4 - core index']
  #allocation1 [shape = 'u32[144,128]{1,0:T(1,128)}', space=vmem, size = 0x12000, scoped, tag = 'internal scratch']
  %s0 = inlined_call_operand.vmem [shape: f32[8,16], index: 0, kind: input, shape index: {}]
  %s1 = inlined_call_operand.vmem [shape: s32[8,1], index: 1, kind: input, shape index: {}]
  %s2 = inlined_call_operand.hbm [shape: f32[1,1,128], index: 2, kind: output, shape index: {}]
  %s3 = sld [smem:[#allocation0]]
  $region18: #{tpu_custom_call.1} parent=0
    _
  %s5 = ssub.s32 1, %s3
  %s6 = scalar_select 0, %s5, %s3
  $region1: #{tpu_custom_call.1} parent=0
    #allocation2 [shape = 'u8[512]{0}', space=vmem, size = 0x400, scoped, tag = 'output window, operand 0, single buffered']
    #allocation3 [shape = 's32[1]{0}', space=sflag, size = 0x4, scoped, tag = 'scoped memory for tpu_custom_call.1']
    %7 = vsyncpa [#allocation3], 0
    // Predicated region
    $region2: #{tpu_custom_call.1} parent=1 // pred_check
      _
    $region3: #{tpu_custom_call.1} parent=1 // pred_check_branch
      %9 = sbr.rel (0) target = $region5
    $region4: #{tpu_custom_call.1} parent=1 // pred_region
      _
    $region5: #{tpu_custom_call.1} parent=1 // pred_fallthru
      _
    // Predicated region
    $region6: #{tpu_custom_call.1} parent=1 // pred_check
      _
    $region7: #{tpu_custom_call.1} parent=1 // pred_check_branch
      %11 = sbr.rel (0) target = $region9
    $region8: #{tpu_custom_call.1} parent=1 // pred_region
      _
    $region9: #{tpu_custom_call.1} parent=1 // pred_fallthru
      _
    %v12 = vld [vmem:[%s0] sm:$0xff]
    %v13 = vld [vmem:[%s1] sm:$0xff]
    %vm14 = vcmask 130048
    %v15 = vsel %vm14, %v12, -inf
    %16 = vmax.xlane.f32.xlu0 %v15
    %v17 = vpop.xlane.xlu0 %16
    %v18 = vsub.f32 %v12, %v17
    %v19 = vmul.f32 %v18, 1.442695
    %v20 = vpow.pop %v19
    %v21 = vlaneseq
    %v22 = vand.u32 %v21, 127
    %23 = vset.pattern.permute.xlu0 0
    %24 = vperm.xlu0 %23, %v13
    %v25 = vpop.permute.xlu0 %24
    %vm26 = vcmp.eq.s32.totalorder %v22, %v25
    %v27 = vsel %vm26, 0.0, %v20
    %v28 = vsel %vm14, %v27, 0.0
    %29 = vadd.xlane.f32.xlu0 %v28
    %v30 = vpop.xlane.xlu0 %29
    %v31 = vsel %vm26, %v18, 0.0
    %v32 = vsel %vm14, %v31, 0.0
    %33 = vadd.xlane.f32.xlu0 %v32
    %v34 = vpop.xlane.xlu0 %33
    %v35 = vmul.f32 %v34, 1.442695
    %v36 = vpow.pop %v35
    %v37 = vadd.f32 %v36, %v30
    %v38 = vlog2.pop %v37
    %v39 = vmul.f32 %v38, 0.6931472
    %v40 = vsub.f32 %v34, %v39
    %v41 = vrcp.pop %v37
    %v42 = vmul.f32 %v30, %v41
    %v43 = vmul.f32 %v42, %v42
    %v44 = vmul.f32 %v43, %v40
    %v45 = vsub.f32 0.0, %v44
    %v46 = vlaneseq
    %v47 = vshrl.u32 %v46, 7
    %s48 = smul.u32 0, 8
    %v49 = vstv %s48
    %v50 = vadd.s32 %v47, %v49
    %vm51 = vcmp.lt.s32.totalorder %v50, 8
    %v52 = vsel %vm51, %v45, 0.0
    %vm53 = vcmask 7168
    %v54 = vsel %vm53, %v52, 0.0
    %55 = vadd.xlane.f32.xlu0 %v54
    %v56 = vpop.xlane.xlu0 %55
    %v57 = vrot.slane %v56, 4
    %v58 = vadd.f32 %v56, %v57
    %v59 = vrot.slane %v58, 2
    %v60 = vadd.f32 %v58, %v59
    %v61 = vrot.slane %v60, 1
    %v62 = vadd.f32 %v60, %v61
    %s63 = vtos %v62
    %v64 = vstv %s63
    %65 = vst [vmem:[#allocation2] sm:$0x1] %v64
    // Predicated region
    $region10: #{tpu_custom_call.1} parent=1 // pred_check
      _
    $region11: #{tpu_custom_call.1} parent=1 // pred_check_branch
      %67 = sbr.rel (0) target = $region13
    $region12: #{tpu_custom_call.1} parent=1 // pred_region
      %s69 = ssub.s32 16, 16
      %70 = vsyncadd [#allocation3], %s69
      %s72 = sshll.u32 [#allocation2], 4
      %s73 = int_to_ptr.vmem [resolvable:$true] %s72
      %75 = dma.vmem_to_hbm [thread:$0]  %s73, 16, %s2, [#allocation3]
    $region13: #{tpu_custom_call.1} parent=1 // pred_fallthru
      _
    // Predicated region
    $region14: #{tpu_custom_call.1} parent=1 // pred_check
      _
    $region15: #{tpu_custom_call.1} parent=1 // pred_check_branch
      %77 = sbr.rel (0) target = $region17
    $region16: #{tpu_custom_call.1} parent=1 // pred_region
      %78 = dma.done [#allocation3], 16
    $region17: #{tpu_custom_call.1} parent=1 // pred_fallthru
      _
    %79 = vsyncpa [#allocation3], 1

</llo_original>
